<compile_context>
chip_gen: v7x
topology: tpu7x:2x2x1
jax: 0.10.0
libtpu: 0.0.40
codegen_flags: <defaults>
</compile_context>

<pallas_src>
import functools

import jax
import jax.numpy as jnp
from jax.experimental import pallas as pl
from jax.experimental.pallas import tpu as pltpu


# ----------------------------- Pallas kernel -------------------------------- #

def _mlp_kernel(x_ref, w1_ref, b1_ref, g_ref, beta_ref, w2_ref, b2_ref, o_ref,
                *, eps, use_bn):
    # layer1 on the MXU: (B, F) bf16 @ (F, H) bf16 -> f32 accumulate
    h = jnp.dot(x_ref[...], w1_ref[...], preferred_element_type=jnp.float32)
    h = h + b1_ref[...]                                  # (1, H) bias broadcast, f32

    if use_bn:
        # BatchNorm1d, training-mode batch statistics (biased variance), all f32.
        mean = jnp.mean(h, axis=0, keepdims=True)        # sublane reduce (XLU)
        centered = h - mean
        var = jnp.mean(centered * centered, axis=0, keepdims=True)
        inv_std = jax.lax.rsqrt(var + eps)               # EUP
        h = centered * inv_std * g_ref[...] + beta_ref[...]

    h = jnp.maximum(h, 0.0)                              # ReLU, f32 VPU

    # layer2 on the MXU: cast only at the MXU input, accumulate f32.
    out = jnp.dot(h.astype(jnp.bfloat16), w2_ref[...],
                  preferred_element_type=jnp.float32)
    o_ref[...] = (out + b2_ref[...]).astype(o_ref.dtype)


# ------------------------------ JAX wrapper ---------------------------------- #

def _round_up(v, m):
    return (v + m - 1) // m * m


def mlp_forward(x, params, *, use_bn=True, eps=1e-5):
    """Fused MLP forward: layer2(relu(bn(layer1(x))))."""
    w1, b1, gamma, beta, w2, b2 = params
    B, nfeat = x.shape
    nhid = w1.shape[1]
    nclass = w2.shape[1]

    # Lane-dense class dim: zero-pad W2/b2 columns to a multiple of 128.
    nclass_p = _round_up(nclass, 128)
    if nclass_p != nclass:
        w2 = jnp.pad(w2, ((0, 0), (0, nclass_p - nclass)))
        b2 = jnp.pad(b2, (0, nclass_p - nclass))

    # bf16 at the MXU inputs (halves HBM/VMEM bytes for the big operands).
    x_b = x.astype(jnp.bfloat16)
    w1_b = w1.astype(jnp.bfloat16)
    w2_b = w2.astype(jnp.bfloat16)
    # f32 epilogue operands.
    b1_r = b1.reshape(1, nhid).astype(jnp.float32)
    g_r = gamma.reshape(1, nhid).astype(jnp.float32)
    beta_r = beta.reshape(1, nhid).astype(jnp.float32)
    b2_r = b2.reshape(1, nclass_p).astype(jnp.float32)

    flops = 2 * B * nfeat * nhid + 2 * B * nhid * nclass_p + 10 * B * nhid
    bytes_accessed = (x_b.size * 2 + w1_b.size * 2 + w2_b.size * 2
                      + (b1_r.size + g_r.size + beta_r.size + b2_r.size) * 4
                      + B * nclass_p * 4)

    kernel = functools.partial(_mlp_kernel, eps=float(eps), use_bn=bool(use_bn))
    out_p = pl.pallas_call(
        kernel,
        out_shape=jax.ShapeDtypeStruct((B, nclass_p), jnp.float32),
        in_specs=[pl.BlockSpec(memory_space=pltpu.MemorySpace.VMEM)
                  for _ in range(7)],
        out_specs=pl.BlockSpec(memory_space=pltpu.MemorySpace.VMEM),
        compiler_params=pltpu.CompilerParams(vmem_limit_bytes=32 * 1024 * 1024),
        cost_estimate=pl.CostEstimate(flops=flops, transcendentals=nhid,
                                      bytes_accessed=bytes_accessed),
    )(x_b, w1_b, b1_r, g_r, beta_r, w2_b, b2_r)
    return out_p[:, :nclass]


# -------------------------------- main --------------------------------------- #

if __name__ == "__main__":
    key = jax.random.PRNGKey(0)
    B, NFEAT, NHID, NCLASS = 64, 64, 128, 10
    ks = jax.random.split(key, 7)

    x = jax.random.normal(ks[0], (B, NFEAT), jnp.float32)
    # nn.Linear-style init; weights stored (fan_in, fan_out).
    lim1 = 1.0 / (NFEAT ** 0.5)
    w1 = jax.random.uniform(ks[1], (NFEAT, NHID), jnp.float32, -lim1, lim1)
    b1 = jax.random.uniform(ks[2], (NHID,), jnp.float32, -lim1, lim1)
    # BN affine params (nontrivial values to exercise the epilogue).
    gamma = 1.0 + 0.1 * jax.random.normal(ks[3], (NHID,), jnp.float32)
    beta = 0.1 * jax.random.normal(ks[4], (NHID,), jnp.float32)
    lim2 = 1.0 / (NHID ** 0.5)
    w2 = jax.random.uniform(ks[5], (NHID, NCLASS), jnp.float32, -lim2, lim2)
    b2 = jax.random.uniform(ks[6], (NCLASS,), jnp.float32, -lim2, lim2)
    params = (w1, b1, gamma, beta, w2, b2)

    out = mlp_forward(x, params, use_bn=True)
    jax.block_until_ready(out)

    # Pure-JAX reference with matching bf16 rounding at the MXU inputs.
    def ref_forward(x, params, eps=1e-5):
        w1, b1, gamma, beta, w2, b2 = params
        xb = x.astype(jnp.bfloat16).astype(jnp.float32)
        w1b = w1.astype(jnp.bfloat16).astype(jnp.float32)
        w2b = w2.astype(jnp.bfloat16).astype(jnp.float32)
        h = xb @ w1b + b1
        mean = h.mean(axis=0, keepdims=True)
        var = ((h - mean) ** 2).mean(axis=0, keepdims=True)
        h = (h - mean) / jnp.sqrt(var + eps) * gamma + beta
        h = jnp.maximum(h, 0.0)
        hb = h.astype(jnp.bfloat16).astype(jnp.float32)
        return hb @ w2b + b2

    ref = ref_forward(x, params)
    assert out.shape == (B, NCLASS)
    assert jnp.allclose(out, ref, atol=1e-2, rtol=1e-2), \
        f"max abs err {float(jnp.max(jnp.abs(out - ref)))}"

    print("KERNEL_OK")
</pallas_src>

<mosaic_0001>
module attributes {stable_mosaic.version = 11 : i64} {
  func.func @_mlp_kernel(%arg0: memref<64x64xbf16, #tpu.memory_space<vmem>>, %arg1: memref<64x128xbf16, #tpu.memory_space<vmem>>, %arg2: memref<1x128xf32, #tpu.memory_space<vmem>>, %arg3: memref<1x128xf32, #tpu.memory_space<vmem>>, %arg4: memref<1x128xf32, #tpu.memory_space<vmem>>, %arg5: memref<128x128xbf16, #tpu.memory_space<vmem>>, %arg6: memref<1x128xf32, #tpu.memory_space<vmem>>, %arg7: memref<64x128xf32, #tpu.memory_space<vmem>>) attributes {dimension_semantics = [], scalar_prefetch = 0 : i64, scratch_operands = 0 : i64, tpu.core_type = #tpu.core_type<tc>} {
    %c0 = arith.constant 0 : index
    %c0_0 = arith.constant 0 : index
    %0 = vector.load %arg0[%c0, %c0_0] : memref<64x64xbf16, #tpu.memory_space<vmem>>, vector<64x64xbf16>
    %c0_1 = arith.constant 0 : index
    %c0_2 = arith.constant 0 : index
    %1 = vector.load %arg1[%c0_1, %c0_2] : memref<64x128xbf16, #tpu.memory_space<vmem>>, vector<64x128xbf16>
    %cst = arith.constant dense<0.000000e+00> : vector<64x128xf32>
    %2 = tpu.matmul %0, %1, %cst {dimension_numbers = #tpu.dot_dimension_numbers<[1], [0], [0], [1], [0, 0, 1, 1], [], []>} : vector<64x64xbf16>, vector<64x128xbf16>, vector<64x128xf32> -> vector<64x128xf32>
    %c0_3 = arith.constant 0 : index
    %c0_4 = arith.constant 0 : index
    %3 = vector.load %arg2[%c0_3, %c0_4] : memref<1x128xf32, #tpu.memory_space<vmem>>, vector<1x128xf32>
    %4 = vector.broadcast %3 : vector<1x128xf32> to vector<64x128xf32>
    %5 = arith.addf %2, %4 : vector<64x128xf32>
    %cst_5 = arith.constant dense<0.000000e+00> : vector<128xf32>
    %6 = vector.multi_reduction <add>, %5, %cst_5 [0] : vector<64x128xf32> to vector<128xf32>
    %7 = vector.shape_cast %6 : vector<128xf32> to vector<1x128xf32>
    %cst_6 = arith.constant 6.400000e+01 : f32
    %8 = vector.broadcast %cst_6 : f32 to vector<1x128xf32>
    %9 = arith.divf %7, %8 : vector<1x128xf32>
    %10 = vector.broadcast %9 : vector<1x128xf32> to vector<64x128xf32>
    %11 = arith.subf %5, %10 : vector<64x128xf32>
    %12 = arith.mulf %11, %11 : vector<64x128xf32>
    %cst_7 = arith.constant dense<0.000000e+00> : vector<128xf32>
    %13 = vector.multi_reduction <add>, %12, %cst_7 [0] : vector<64x128xf32> to vector<128xf32>
    %14 = vector.shape_cast %13 : vector<128xf32> to vector<1x128xf32>
    %cst_8 = arith.constant 6.400000e+01 : f32
    %15 = vector.broadcast %cst_8 : f32 to vector<1x128xf32>
    %16 = arith.divf %14, %15 : vector<1x128xf32>
    %cst_9 = arith.constant 9.99999974E-6 : f32
    %17 = vector.broadcast %cst_9 : f32 to vector<1x128xf32>
    %18 = arith.addf %16, %17 : vector<1x128xf32>
    %19 = math.rsqrt %18 : vector<1x128xf32>
    %20 = vector.broadcast %19 : vector<1x128xf32> to vector<64x128xf32>
    %21 = arith.mulf %11, %20 : vector<64x128xf32>
    %c0_10 = arith.constant 0 : index
    %c0_11 = arith.constant 0 : index
    %22 = vector.load %arg3[%c0_10, %c0_11] : memref<1x128xf32, #tpu.memory_space<vmem>>, vector<1x128xf32>
    %23 = vector.broadcast %22 : vector<1x128xf32> to vector<64x128xf32>
    %24 = arith.mulf %21, %23 : vector<64x128xf32>
    %c0_12 = arith.constant 0 : index
    %c0_13 = arith.constant 0 : index
    %25 = vector.load %arg4[%c0_12, %c0_13] : memref<1x128xf32, #tpu.memory_space<vmem>>, vector<1x128xf32>
    %26 = vector.broadcast %25 : vector<1x128xf32> to vector<64x128xf32>
    %27 = arith.addf %24, %26 : vector<64x128xf32>
    %cst_14 = arith.constant 0.000000e+00 : f32
    %28 = vector.broadcast %cst_14 : f32 to vector<64x128xf32>
    %29 = arith.maximumf %27, %28 : vector<64x128xf32>
    %30 = arith.truncf %29 : vector<64x128xf32> to vector<64x128xbf16>
    %c0_15 = arith.constant 0 : index
    %c0_16 = arith.constant 0 : index
    %31 = vector.load %arg5[%c0_15, %c0_16] : memref<128x128xbf16, #tpu.memory_space<vmem>>, vector<128x128xbf16>
    %cst_17 = arith.constant dense<0.000000e+00> : vector<64x128xf32>
    %32 = tpu.matmul %30, %31, %cst_17 {dimension_numbers = #tpu.dot_dimension_numbers<[1], [0], [0], [1], [0, 0, 1, 1], [], []>} : vector<64x128xbf16>, vector<128x128xbf16>, vector<64x128xf32> -> vector<64x128xf32>
    %c0_18 = arith.constant 0 : index
    %c0_19 = arith.constant 0 : index
    %33 = vector.load %arg6[%c0_18, %c0_19] : memref<1x128xf32, #tpu.memory_space<vmem>>, vector<1x128xf32>
    %34 = vector.broadcast %33 : vector<1x128xf32> to vector<64x128xf32>
    %35 = arith.addf %32, %34 : vector<64x128xf32>
    %c0_20 = arith.constant 0 : index
    %c0_21 = arith.constant 0 : index
    %36 = vector.load %arg7[%c0_20, %c0_21] : memref<64x128xf32, #tpu.memory_space<vmem>>, vector<64x128xf32>
    tpu.vector_store %arg7[%c0_20, %c0_21], %35 {strides = array<i32>} : memref<64x128xf32, #tpu.memory_space<vmem>>, vector<64x128xf32>,
    return
  }
}

</mosaic_0001>

<llo_original>
// kernel: tpu_custom_call.1
$region0: #{tpu_custom_call.1}
  #allocation0 [shape = 'u32[]', space=smem, size = 0x4, offset = 0x4, fixed_abs, tag = 'smem constant byte address 0x4 - core index']
  #allocation1 [shape = 'u32[144,128]{1,0:T(1,128)}', space=vmem, size = 0x12000, scoped, tag = 'internal scratch']
  %s0 = inlined_call_operand.hbm [shape: bf16[64,64], index: 0, kind: input, shape index: {}]
  %s1 = inlined_call_operand.hbm [shape: bf16[64,128], index: 1, kind: input, shape index: {}]
  %s2 = inlined_call_operand.vmem [shape: f32[1,128], index: 2, kind: input, shape index: {}]
  %s3 = inlined_call_operand.vmem [shape: f32[1,128], index: 3, kind: input, shape index: {}]
  %s4 = inlined_call_operand.vmem [shape: f32[1,128], index: 4, kind: input, shape index: {}]
  %s5 = inlined_call_operand.hbm [shape: bf16[128,128], index: 5, kind: input, shape index: {}]
  %s6 = inlined_call_operand.vmem [shape: f32[1,128], index: 6, kind: input, shape index: {}]
  %s7 = inlined_call_operand.hbm [shape: f32[64,128], index: 7, kind: output, shape index: {}]
  %s8 = sld [smem:[#allocation0]]
  $region50: #{tpu_custom_call.1} parent=0
    _
  %s10 = ssub.s32 1, %s8
  %s11 = scalar_select 0, %s10, %s8
  $region1: #{tpu_custom_call.1} parent=0
    #allocation2 [shape = 'u8[16384]{0}', space=vmem, size = 0x4000, scoped, tag = 'input window, operand 0, single buffered']
    #allocation3 [shape = 's32[1]{0}', space=sflag, size = 0x4, scoped, tag = 'scoped memory for tpu_custom_call.1']
    #allocation4 [shape = 's32[1]{0}', space=sflag, size = 0x4, scoped, tag = 'scoped memory for tpu_custom_call.1']
    #allocation5 [shape = 'u8[16384]{0}', space=vmem, size = 0x4000, scoped, tag = 'input window, operand 1, single buffered']
    #allocation6 [shape = 's32[1]{0}', space=sflag, size = 0x4, scoped, tag = 'scoped memory for tpu_custom_call.1']
    #allocation7 [shape = 'u8[32768]{0}', space=vmem, size = 0x8000, scoped, tag = 'input window, operand 5, single buffered']
    #allocation8 [shape = 'u8[32768]{0}', space=vmem, size = 0x8000, scoped, tag = 'output window, operand 0, single buffered']
    %12 = vsyncpa [#allocation3], 0
    %13 = vsyncpa [#allocation6], 0
    %14 = vsyncpa [#allocation4], 0
    // Predicated region
    $region2: #{tpu_custom_call.1} parent=1 // pred_check
      _
    $region3: #{tpu_custom_call.1} parent=1 // pred_check_branch
      %16 = sbr.rel (0) target = $region5
    $region4: #{tpu_custom_call.1} parent=1 // pred_region
      %s18 = ssub.s32 512, 512
      %19 = vsyncadd [#allocation3], %s18
      %s20 = sshll.u32 [#allocation2], 4
      %s21 = int_to_ptr.vmem [resolvable:$true] %s20
      %26 = dma.hbm_to_vmem [thread:$0]  %s0, 512, %s21, [#allocation3], 64, 64, 4
    $region5: #{tpu_custom_call.1} parent=1 // pred_fallthru
      _
    // Predicated region
    $region6: #{tpu_custom_call.1} parent=1 // pred_check
      _
    $region7: #{tpu_custom_call.1} parent=1 // pred_check_branch
      %28 = sbr.rel (0) target = $region9
    $region8: #{tpu_custom_call.1} parent=1 // pred_region
      %s30 = ssub.s32 512, 512
      %31 = vsyncadd [#allocation6], %s30
      %s32 = sshll.u32 [#allocation5], 4
      %s33 = int_to_ptr.vmem [resolvable:$true] %s32
      %38 = dma.hbm_to_vmem [thread:$0]  %s1, 512, %s33, [#allocation6], 64, 64, 4
    $region9: #{tpu_custom_call.1} parent=1 // pred_fallthru
      _
    // Predicated region
    $region10: #{tpu_custom_call.1} parent=1 // pred_check
      _
    $region11: #{tpu_custom_call.1} parent=1 // pred_check_branch
      %40 = sbr.rel (0) target = $region13
    $region12: #{tpu_custom_call.1} parent=1 // pred_region
      _
    $region13: #{tpu_custom_call.1} parent=1 // pred_fallthru
      _
    // Predicated region
    $region14: #{tpu_custom_call.1} parent=1 // pred_check
      _
    $region15: #{tpu_custom_call.1} parent=1 // pred_check_branch
      %42 = sbr.rel (0) target = $region17
    $region16: #{tpu_custom_call.1} parent=1 // pred_region
      _
    $region17: #{tpu_custom_call.1} parent=1 // pred_fallthru
      _
    // Predicated region
    $region18: #{tpu_custom_call.1} parent=1 // pred_check
      _
    $region19: #{tpu_custom_call.1} parent=1 // pred_check_branch
      %44 = sbr.rel (0) target = $region21
    $region20: #{tpu_custom_call.1} parent=1 // pred_region
      _
    $region21: #{tpu_custom_call.1} parent=1 // pred_fallthru
      _
    // Predicated region
    $region22: #{tpu_custom_call.1} parent=1 // pred_check
      _
    $region23: #{tpu_custom_call.1} parent=1 // pred_check_branch
      %46 = sbr.rel (0) target = $region25
    $region24: #{tpu_custom_call.1} parent=1 // pred_region
      %s48 = ssub.s32 1024, 1024
      %49 = vsyncadd [#allocation6], %s48
      %s50 = sshll.u32 [#allocation7], 4
      %s51 = int_to_ptr.vmem [resolvable:$true] %s50
      %56 = dma.hbm_to_vmem [thread:$0]  %s5, 1024, %s51, [#allocation6], 64, 64, 4
    $region25: #{tpu_custom_call.1} parent=1 // pred_fallthru
      _
    // Predicated region
    $region26: #{tpu_custom_call.1} parent=1 // pred_check
      _
    $region27: #{tpu_custom_call.1} parent=1 // pred_check_branch
      %58 = sbr.rel (0) target = $region29
    $region28: #{tpu_custom_call.1} parent=1 // pred_region
      _
    $region29: #{tpu_custom_call.1} parent=1 // pred_fallthru
      _
    // Predicated region
    $region30: #{tpu_custom_call.1} parent=1 // pred_check
      _
    $region31: #{tpu_custom_call.1} parent=1 // pred_check_branch
      %60 = sbr.rel (0) target = $region33
    $region32: #{tpu_custom_call.1} parent=1 // pred_region
      %61 = dma.done [#allocation3], 512
    $region33: #{tpu_custom_call.1} parent=1 // pred_fallthru
      _
    // Predicated region
    $region34: #{tpu_custom_call.1} parent=1 // pred_check
      _
    $region35: #{tpu_custom_call.1} parent=1 // pred_check_branch
      %63 = sbr.rel (0) target = $region37
    $region36: #{tpu_custom_call.1} parent=1 // pred_region
      %64 = dma.done [#allocation6], 512
    $region37: #{tpu_custom_call.1} parent=1 // pred_fallthru
      _
    // Predicated region
    $region38: #{tpu_custom_call.1} parent=1 // pred_check
      _
    $region39: #{tpu_custom_call.1} parent=1 // pred_check_branch
      %66 = sbr.rel (0) target = $region41
    $region40: #{tpu_custom_call.1} parent=1 // pred_region
      %67 = dma.done [#allocation6], 1024
    $region41: #{tpu_custom_call.1} parent=1 // pred_fallthru
      _
    %v69 = vld [vmem:[#allocation2] sm:$0xf]
    %v70 = vld [vmem:[#allocation2 + $0x4] sm:$0xf]
    %v71 = vld [vmem:[#allocation2 + $0x8] sm:$0xf]
    %v72 = vld [vmem:[#allocation2 + $0xc] sm:$0xf]
    %v73 = vld [vmem:[#allocation2 + $0x10] sm:$0xf]
    %v74 = vld [vmem:[#allocation2 + $0x14] sm:$0xf]
    %v75 = vld [vmem:[#allocation2 + $0x18] sm:$0xf]
    %v76 = vld [vmem:[#allocation2 + $0x1c] sm:$0xf]
    %v77 = vld [vmem:[#allocation5] sm:$0xf]
    %v78 = vld [vmem:[#allocation5 + $0x4] sm:$0xf]
    %v79 = vld [vmem:[#allocation5 + $0x8] sm:$0xf]
    %v80 = vld [vmem:[#allocation5 + $0xc] sm:$0xf]
    %v81 = vld [vmem:[#allocation5 + $0x10] sm:$0xf]
    %v82 = vld [vmem:[#allocation5 + $0x14] sm:$0xf]
    %v83 = vld [vmem:[#allocation5 + $0x18] sm:$0xf]
    %v84 = vld [vmem:[#allocation5 + $0x1c] sm:$0xf]
    %v85 = vld [vmem:[%s2] sm:$0x1]
    %v87 = vlaneseq
    %v88 = vshrl.u32 %v87, 7
    %v89 = vsub.s32 0, %v88
    %v90 = vrot.slane %v85, %v89
    %v100 = vunpack.c.l.b16 %v69
    %v101 = vunpack.c.l.b16 %v70
    %v102 = vunpack.c.l.b16 %v71
    %v103 = vunpack.c.l.b16 %v72
    %v104 = vunpack.c.l.b16 %v73
    %v105 = vunpack.c.l.b16 %v74
    %v106 = vunpack.c.l.b16 %v75
    %v107 = vunpack.c.l.b16 %v76
    %v108 = vpack.c.b16 %v101, %v100
    %v109 = vpack.c.b16 %v103, %v102
    %v110 = vpack.c.b16 %v105, %v104
    %v111 = vpack.c.b16 %v107, %v106
    %v120 = vunpack.c.l.b16 %v77
    %v121 = vunpack.c.l.b16 %v78
    %v122 = vunpack.c.l.b16 %v79
    %v123 = vunpack.c.l.b16 %v80
    %v124 = vunpack.c.l.b16 %v81
    %v125 = vunpack.c.l.b16 %v82
    %v126 = vunpack.c.l.b16 %v83
    %v127 = vunpack.c.l.b16 %v84
    %v128 = vpack.c.b16 %v121, %v120
    %v129 = vpack.c.b16 %v123, %v122
    %v130 = vpack.c.b16 %v125, %v124
    %v131 = vpack.c.b16 %v127, %v126
    %vm136 = vcmask 523264
    %v138 = vsel %vm136, %v108, 0
    %v141 = vsel %vm136, %v109, 0
    %v144 = vsel %vm136, %v110, 0
    %v147 = vsel %vm136, %v111, 0
    %149 = vmatprep.subr.bf16.mxu0 0
    %150 = vmatpush1.bf16.msra.mxu0 %v128
    %151 = vmatprep.subr.bf16.mxu0 0
    %152 = vmatpush1.bf16.msra.mxu0 %v129
    %153 = vmatprep.subr.bf16.mxu0 0
    %154 = vmatpush1.bf16.msra.mxu0 %v130
    %155 = vmatprep.subr.bf16.mxu0 0
    %156 = vmatpush1.bf16.msra.mxu0 %v131
    %157 = vmatprep.subr.bf16.mxu0 0
    %158 = vmatpush1.bf16.msra.mxu0 0
    %159 = vmatprep.subr.bf16.mxu0 0
    %160 = vmatpush1.bf16.msra.mxu0 0
    %161 = vmatprep.subr.bf16.mxu0 0
    %162 = vmatpush1.bf16.msra.mxu0 0
    %163 = vmatprep.subr.bf16.mxu0 0
    %164 = vmatpush1.bf16.msra.mxu0 0
    %165 = vmatprep.subr.bf16.mxu0 0
    %166 = vmatpush1.bf16.msra.mxu0 0
    %167 = vmatprep.subr.bf16.mxu0 0
    %168 = vmatpush1.bf16.msra.mxu0 0
    %169 = vmatprep.subr.bf16.mxu0 0
    %170 = vmatpush1.bf16.msra.mxu0 0
    %171 = vmatprep.subr.bf16.mxu0 0
    %172 = vmatpush1.bf16.msra.mxu0 0
    %173 = vmatprep.subr.bf16.mxu0 0
    %174 = vmatpush1.bf16.msra.mxu0 0
    %175 = vmatprep.subr.bf16.mxu0 0
    %176 = vmatpush1.bf16.msra.mxu0 0
    %177 = vmatprep.subr.bf16.mxu0 0
    %178 = vmatpush1.bf16.msra.mxu0 0
    %179 = vmatprep.subr.bf16.mxu0 0
    %180 = vmatpush1.bf16.msra.mxu0 0
    %181 = vmatprep.mubr.bf16.mxu0 0
    %182 = vmatmul.mubr.bf16.gmra.mrb[0].mxu0 %v138
    %v183 = vpop.f32.mrb[0].mxu0
    %v184 = vadd.f32 %v90, %v183
    %v185 = vpop.f32.mrb[0].mxu0
    %v186 = vpop.f32.mrb[0].mxu0
    %v187 = vadd.f32 %v90, %v186
    %v188 = vpop.f32.mrb[0].mxu0
    %189 = vmatprep.mubr.bf16.mxu0 0
    %190 = vmatmul.mubr.bf16.gmra.mrb[0].mxu0 %v141
    %v191 = vpop.f32.mrb[0].mxu0
    %v192 = vadd.f32 %v90, %v191
    %v193 = vpop.f32.mrb[0].mxu0
    %v194 = vpop.f32.mrb[0].mxu0
    %v195 = vadd.f32 %v90, %v194
    %v196 = vpop.f32.mrb[0].mxu0
    %197 = vmatprep.mubr.bf16.mxu0 0
    %198 = vmatmul.mubr.bf16.gmra.mrb[0].mxu0 %v144
    %v199 = vpop.f32.mrb[0].mxu0
    %v200 = vadd.f32 %v90, %v199
    %v201 = vpop.f32.mrb[0].mxu0
    %v202 = vpop.f32.mrb[0].mxu0
    %v203 = vadd.f32 %v90, %v202
    %v204 = vpop.f32.mrb[0].mxu0
    %205 = vmatprep.mubr.bf16.mxu0 0
    %206 = vmatmul.mubr.bf16.gmra.mrb[0].mxu0 %v147
    %v207 = vpop.f32.mrb[0].mxu0
    %v208 = vadd.f32 %v90, %v207
    %v209 = vpop.f32.mrb[0].mxu0
    %v210 = vpop.f32.mrb[0].mxu0
    %v211 = vadd.f32 %v90, %v210
    %v212 = vpop.f32.mrb[0].mxu0
    %213 = vdwg.mxu0
    %v214 = vadd.f32 %v184, %v187
    %v215 = vadd.f32 %v214, %v192
    %v216 = vadd.f32 %v215, %v195
    %v217 = vadd.f32 %v216, %v200
    %v218 = vadd.f32 %v217, %v203
    %v219 = vadd.f32 %v218, %v208
    %v220 = vadd.f32 %v219, %v211
    %v221 = vrot.slane %v220, 4
    %v222 = vadd.f32 %v220, %v221
    %v223 = vrot.slane %v222, 2
    %v224 = vadd.f32 %v222, %v223
    %v225 = vrot.slane %v224, 1
    %v226 = vadd.f32 %v224, %v225
    %v227 = vrcp.pop 64.0
    %v228 = vmul.f32 %v226, %v227
    %v229 = vsub.f32 %v184, %v228
    %v230 = vsub.f32 %v187, %v228
    %v231 = vsub.f32 %v192, %v228
    %v232 = vsub.f32 %v195, %v228
    %v233 = vsub.f32 %v200, %v228
    %v234 = vsub.f32 %v203, %v228
    %v235 = vsub.f32 %v208, %v228
    %v236 = vsub.f32 %v211, %v228
    %v237 = vmul.f32 %v229, %v229
    %v238 = vmul.f32 %v230, %v230
    %v239 = vmul.f32 %v231, %v231
    %v240 = vmul.f32 %v232, %v232
    %v241 = vmul.f32 %v233, %v233
    %v242 = vmul.f32 %v234, %v234
    %v243 = vmul.f32 %v235, %v235
    %v244 = vmul.f32 %v236, %v236
    %v245 = vadd.f32 %v237, %v238
    %v246 = vadd.f32 %v245, %v239
    %v247 = vadd.f32 %v246, %v240
    %v248 = vadd.f32 %v247, %v241
    %v249 = vadd.f32 %v248, %v242
    %v250 = vadd.f32 %v249, %v243
    %v251 = vadd.f32 %v250, %v244
    %v252 = vrot.slane %v251, 4
    %v253 = vadd.f32 %v251, %v252
    %v254 = vrot.slane %v253, 2
    %v255 = vadd.f32 %v253, %v254
    %v256 = vrot.slane %v255, 1
    %v257 = vadd.f32 %v255, %v256
    %v258 = vmul.f32 %v257, %v227
    %v259 = vadd.f32 %v258, 1e-05
    %v260 = vrsqrt.pop %v259
    %v261 = vmul.f32 %v229, %v260
    %v262 = vmul.f32 %v230, %v260
    %v263 = vmul.f32 %v231, %v260
    %v264 = vmul.f32 %v232, %v260
    %v265 = vmul.f32 %v233, %v260
    %v266 = vmul.f32 %v234, %v260
    %v267 = vmul.f32 %v235, %v260
    %v268 = vmul.f32 %v236, %v260
    %v269 = vld [vmem:[%s3] sm:$0x1]
    %v271 = vlaneseq
    %v272 = vshrl.u32 %v271, 7
    %v273 = vsub.s32 0, %v272
    %v274 = vrot.slane %v269, %v273
    %v276 = vmul.f32 %v261, %v274
    %v277 = vmul.f32 %v262, %v274
    %v278 = vmul.f32 %v263, %v274
    %v279 = vmul.f32 %v264, %v274
    %v280 = vmul.f32 %v265, %v274
    %v281 = vmul.f32 %v266, %v274
    %v282 = vmul.f32 %v267, %v274
    %v283 = vmul.f32 %v268, %v274
    %v284 = vld [vmem:[%s4] sm:$0x1]
    %v286 = vlaneseq
    %v287 = vshrl.u32 %v286, 7
    %v288 = vsub.s32 0, %v287
    %v289 = vrot.slane %v284, %v288
    %v291 = vadd.f32 %v276, %v289
    %v292 = vadd.f32 %v277, %v289
    %v293 = vadd.f32 %v278, %v289
    %v294 = vadd.f32 %v279, %v289
    %v295 = vadd.f32 %v280, %v289
    %v296 = vadd.f32 %v281, %v289
    %v297 = vadd.f32 %v282, %v289
    %v298 = vadd.f32 %v283, %v289
    %v299 = vmax.f32 %v291, 0.0
    %v300 = vmax.f32 %v292, 0.0
    %v301 = vmax.f32 %v293, 0.0
    %v302 = vmax.f32 %v294, 0.0
    %v303 = vmax.f32 %v295, 0.0
    %v304 = vmax.f32 %v296, 0.0
    %v305 = vmax.f32 %v297, 0.0
    %v306 = vmax.f32 %v298, 0.0
    %v307 = vpack.c.bf16 %v300, %v299
    %v308 = vpack.c.bf16 %v302, %v301
    %v309 = vpack.c.bf16 %v304, %v303
    %v310 = vpack.c.bf16 %v306, %v305
    %v311 = vld [vmem:[#allocation7] sm:$0xf]
    %v312 = vld [vmem:[#allocation7 + $0x4] sm:$0xf]
    %v313 = vld [vmem:[#allocation7 + $0x8] sm:$0xf]
    %v314 = vld [vmem:[#allocation7 + $0xc] sm:$0xf]
    %v315 = vld [vmem:[#allocation7 + $0x10] sm:$0xf]
    %v316 = vld [vmem:[#allocation7 + $0x14] sm:$0xf]
    %v317 = vld [vmem:[#allocation7 + $0x18] sm:$0xf]
    %v318 = vld [vmem:[#allocation7 + $0x1c] sm:$0xf]
    %v319 = vld [vmem:[#allocation7 + $0x20] sm:$0xf]
    %v320 = vld [vmem:[#allocation7 + $0x24] sm:$0xf]
    %v321 = vld [vmem:[#allocation7 + $0x28] sm:$0xf]
    %v322 = vld [vmem:[#allocation7 + $0x2c] sm:$0xf]
    %v323 = vld [vmem:[#allocation7 + $0x30] sm:$0xf]
    %v324 = vld [vmem:[#allocation7 + $0x34] sm:$0xf]
    %v325 = vld [vmem:[#allocation7 + $0x38] sm:$0xf]
    %v326 = vld [vmem:[#allocation7 + $0x3c] sm:$0xf]
    %v327 = vld [vmem:[%s6] sm:$0x1]
    %v329 = vlaneseq
    %v330 = vshrl.u32 %v329, 7
    %v331 = vsub.s32 0, %v330
    %v332 = vrot.slane %v327, %v331
    %v350 = vunpack.c.l.b16 %v311
    %v351 = vunpack.c.l.b16 %v312
    %v352 = vunpack.c.l.b16 %v313
    %v353 = vunpack.c.l.b16 %v314
    %v354 = vunpack.c.l.b16 %v315
    %v355 = vunpack.c.l.b16 %v316
    %v356 = vunpack.c.l.b16 %v317
    %v357 = vunpack.c.l.b16 %v318
    %v358 = vunpack.c.l.b16 %v319
    %v359 = vunpack.c.l.b16 %v320
    %v360 = vunpack.c.l.b16 %v321
    %v361 = vunpack.c.l.b16 %v322
    %v362 = vunpack.c.l.b16 %v323
    %v363 = vunpack.c.l.b16 %v324
    %v364 = vunpack.c.l.b16 %v325
    %v365 = vunpack.c.l.b16 %v326
    %v366 = vpack.c.b16 %v351, %v350
    %v367 = vpack.c.b16 %v353, %v352
    %v368 = vpack.c.b16 %v355, %v354
    %v369 = vpack.c.b16 %v357, %v356
    %v370 = vpack.c.b16 %v359, %v358
    %v371 = vpack.c.b16 %v361, %v360
    %v372 = vpack.c.b16 %v363, %v362
    %v373 = vpack.c.b16 %v365, %v364
    %382 = vmatprep.subr.bf16.mxu0 0
    %383 = vmatpush1.bf16.msra.mxu0 %v366
    %384 = vmatprep.subr.bf16.mxu0 0
    %385 = vmatpush1.bf16.msra.mxu0 %v367
    %386 = vmatprep.subr.bf16.mxu0 0
    %387 = vmatpush1.bf16.msra.mxu0 %v368
    %388 = vmatprep.subr.bf16.mxu0 0
    %389 = vmatpush1.bf16.msra.mxu0 %v369
    %390 = vmatprep.subr.bf16.mxu0 0
    %391 = vmatpush1.bf16.msra.mxu0 %v370
    %392 = vmatprep.subr.bf16.mxu0 0
    %393 = vmatpush1.bf16.msra.mxu0 %v371
    %394 = vmatprep.subr.bf16.mxu0 0
    %395 = vmatpush1.bf16.msra.mxu0 %v372
    %396 = vmatprep.subr.bf16.mxu0 0
    %397 = vmatpush1.bf16.msra.mxu0 %v373
    %398 = vmatprep.subr.bf16.mxu0 0
    %399 = vmatpush1.bf16.msra.mxu0 0
    %400 = vmatprep.subr.bf16.mxu0 0
    %401 = vmatpush1.bf16.msra.mxu0 0
    %402 = vmatprep.subr.bf16.mxu0 0
    %403 = vmatpush1.bf16.msra.mxu0 0
    %404 = vmatprep.subr.bf16.mxu0 0
    %405 = vmatpush1.bf16.msra.mxu0 0
    %406 = vmatprep.subr.bf16.mxu0 0
    %407 = vmatpush1.bf16.msra.mxu0 0
    %408 = vmatprep.subr.bf16.mxu0 0
    %409 = vmatpush1.bf16.msra.mxu0 0
    %410 = vmatprep.subr.bf16.mxu0 0
    %411 = vmatpush1.bf16.msra.mxu0 0
    %412 = vmatprep.subr.bf16.mxu0 0
    %413 = vmatpush1.bf16.msra.mxu0 0
    %414 = vmatprep.mubr.bf16.mxu0 0
    %415 = vmatmul.mubr.bf16.gmra.mrb[0].mxu0 %v307
    %v416 = vpop.f32.mrb[0].mxu0
    %v417 = vadd.f32 %v332, %v416
    %v418 = vpop.f32.mrb[0].mxu0
    %v419 = vpop.f32.mrb[0].mxu0
    %v420 = vadd.f32 %v332, %v419
    %v421 = vpop.f32.mrb[0].mxu0
    %422 = vmatprep.mubr.bf16.mxu0 0
    %423 = vmatmul.mubr.bf16.gmra.mrb[0].mxu0 %v308
    %v424 = vpop.f32.mrb[0].mxu0
    %v425 = vadd.f32 %v332, %v424
    %v426 = vpop.f32.mrb[0].mxu0
    %v427 = vpop.f32.mrb[0].mxu0
    %v428 = vadd.f32 %v332, %v427
    %v429 = vpop.f32.mrb[0].mxu0
    %430 = vmatprep.mubr.bf16.mxu0 0
    %431 = vmatmul.mubr.bf16.gmra.mrb[0].mxu0 %v309
    %v432 = vpop.f32.mrb[0].mxu0
    %v433 = vadd.f32 %v332, %v432
    %v434 = vpop.f32.mrb[0].mxu0
    %v435 = vpop.f32.mrb[0].mxu0
    %v436 = vadd.f32 %v332, %v435
    %v437 = vpop.f32.mrb[0].mxu0
    %438 = vmatprep.mubr.bf16.mxu0 0
    %439 = vmatmul.mubr.bf16.gmra.mrb[0].mxu0 %v310
    %v440 = vpop.f32.mrb[0].mxu0
    %v441 = vadd.f32 %v332, %v440
    %v442 = vpop.f32.mrb[0].mxu0
    %v443 = vpop.f32.mrb[0].mxu0
    %v444 = vadd.f32 %v332, %v443
    %v445 = vpop.f32.mrb[0].mxu0
    %446 = vdwg.mxu0
    %447 = vst [vmem:[#allocation8] sm:$0xff] %v417
    %448 = vst [vmem:[#allocation8 + $0x8] sm:$0xff] %v420
    %449 = vst [vmem:[#allocation8 + $0x10] sm:$0xff] %v425
    %450 = vst [vmem:[#allocation8 + $0x18] sm:$0xff] %v428
    %451 = vst [vmem:[#allocation8 + $0x20] sm:$0xff] %v433
    %452 = vst [vmem:[#allocation8 + $0x28] sm:$0xff] %v436
    %453 = vst [vmem:[#allocation8 + $0x30] sm:$0xff] %v441
    %454 = vst [vmem:[#allocation8 + $0x38] sm:$0xff] %v444
    // Predicated region
    $region42: #{tpu_custom_call.1} parent=1 // pred_check
      _
    $region43: #{tpu_custom_call.1} parent=1 // pred_check_branch
      %456 = sbr.rel (0) target = $region45
    $region44: #{tpu_custom_call.1} parent=1 // pred_region
      %s458 = ssub.s32 1024, 1024
      %459 = vsyncadd [#allocation4], %s458
      %s460 = sshll.u32 [#allocation8], 4
      %s461 = int_to_ptr.vmem [resolvable:$true] %s460
      %466 = dma.vmem_to_hbm [thread:$0]  %s461, 1024, %s7, [#allocation4], 128, 128, 8
    $region45: #{tpu_custom_call.1} parent=1 // pred_fallthru
      _
    // Predicated region
    $region46: #{tpu_custom_call.1} parent=1 // pred_check
      _
    $region47: #{tpu_custom_call.1} parent=1 // pred_check_branch
      %468 = sbr.rel (0) target = $region49
    $region48: #{tpu_custom_call.1} parent=1 // pred_region
      %469 = dma.done [#allocation4], 1024
    $region49: #{tpu_custom_call.1} parent=1 // pred_fallthru
      _
    %470 = vsyncpa [#allocation3], 1
    %471 = vsyncpa [#allocation6], 1
    %472 = vsyncpa [#allocation4], 1

</llo_original>
